<compile_context>
chip_gen: v7x
topology: tpu7x:2x2x1
jax: 0.10.0
libtpu: 0.0.40
codegen_flags: <defaults>
</compile_context>

<pallas_src>
import jax
import jax.numpy as jnp
from jax.experimental import pallas as pl
from jax.experimental.pallas import tpu as pltpu

N_IN, H1, H2, N_OUT = 7, 4, 2, 2
LANES = 128

# Static offsets into the packed 48-float parameter vector.
_W1_OFF = 0
_B1_OFF = _W1_OFF + N_IN * H1          # 28
_W2_OFF = _B1_OFF + H1                 # 32
_B2_OFF = _W2_OFF + H1 * H2            # 40
_W3_OFF = _B2_OFF + H2                 # 42
_B3_OFF = _W3_OFF + H2 * N_OUT         # 46
_P_LEN = _B3_OFF + N_OUT               # 48


def mlp_kernel(x_ref, p_ref, o_ref):
    # x_ref: (7, TR, 128) VMEM tile; o_ref: (2, TR, 128) VMEM tile.
    # p_ref: packed f32[48] in SMEM; scalar reads broadcast across the vreg,
    # so every MAC is a full-width VPU op (no MXU, no cross-lane work).
    x = [x_ref[k].astype(jnp.float32) for k in range(N_IN)]   # 7 x (TR, 128)

    h1 = []
    for o in range(H1):                                       # fc1 + ReLU
        acc = x[0] * p_ref[_W1_OFF + o * N_IN]
        for k in range(1, N_IN):
            acc = acc + x[k] * p_ref[_W1_OFF + o * N_IN + k]
        h1.append(jnp.maximum(acc + p_ref[_B1_OFF + o], 0.0))

    h2 = []
    for o in range(H2):                                       # fc2 + ReLU
        acc = h1[0] * p_ref[_W2_OFF + o * H1]
        for k in range(1, H1):
            acc = acc + h1[k] * p_ref[_W2_OFF + o * H1 + k]
        h2.append(jnp.maximum(acc + p_ref[_B2_OFF + o], 0.0))

    for o in range(N_OUT):                                    # fc3
        acc = h2[0] * p_ref[_W3_OFF + o * H2]
        for k in range(1, H2):
            acc = acc + h2[k] * p_ref[_W3_OFF + o * H2 + k]
        o_ref[o] = (acc + p_ref[_B3_OFF + o]).astype(o_ref.dtype)


def _round_up(a, b):
    return (a + b - 1) // b * b


def _pack_params(params):
    w1, b1, w2, b2, w3, b3 = params                   # torch layout: (out,in), (out,)
    p = jnp.concatenate([w1.reshape(-1), b1.reshape(-1),
                         w2.reshape(-1), b2.reshape(-1),
                         w3.reshape(-1), b3.reshape(-1)]).astype(jnp.float32)
    assert p.shape == (_P_LEN,)
    return p


def net_7_2_forward_fm(x_fm, params, *, tr=1024, io_dtype=jnp.float32):
    """Feature-major path: x_fm (7, B) -> (2, B). No wrapper transposes."""
    B = x_fm.shape[1]
    R = pl.cdiv(B, LANES)                             # batch as R rows of 128 lanes
    # Target ~4 grid steps (pipelining + megacore), tiles as big as possible,
    # capped at 1024 sublane rows so double-buffered VMEM stays < 10 MiB.
    TR = min(tr, max(8, _round_up(pl.cdiv(R, 4), 8)))
    R_pad = _round_up(R, TR)
    B_pad = R_pad * LANES

    xt = x_fm.astype(io_dtype)
    if B_pad != B:
        xt = jnp.pad(xt, ((0, 0), (0, B_pad - B)))    # zero-pad tail tile
    x3 = xt.reshape(N_IN, R_pad, LANES)

    out3 = pl.pallas_call(
        mlp_kernel,
        out_shape=jax.ShapeDtypeStruct((N_OUT, R_pad, LANES), io_dtype),
        grid=(R_pad // TR,),
        in_specs=[
            pl.BlockSpec((N_IN, TR, LANES), lambda i: (0, i, 0)),
            pl.BlockSpec(memory_space=pltpu.MemorySpace.SMEM),   # packed params
        ],
        out_specs=pl.BlockSpec((N_OUT, TR, LANES), lambda i: (0, i, 0)),
        compiler_params=pltpu.CompilerParams(
            dimension_semantics=("parallel",)),       # 2 TCs on v7x; no-op elsewhere
    )(x3, _pack_params(params))

    return out3.reshape(N_OUT, B_pad)[:, :B]          # (2, B)


def net_7_2_forward(x, params, *, tr=1024, io_dtype=jnp.float32):
    """x: (B, 7) -> (B, 2), same semantics as Net_7_2.forward.

    Thin batch-major shim around the feature-major kernel; callers that can
    produce/consume (7,B)/(2,B) should use net_7_2_forward_fm directly to
    avoid the surrounding transposes entirely.
    """
    out_fm = net_7_2_forward_fm(jnp.transpose(x), params, tr=tr, io_dtype=io_dtype)
    return jnp.transpose(out_fm).astype(x.dtype)


def init_params(key):
    """PyTorch nn.Linear-style init; weights stored (out, in), biases (out,)."""
    def linear(key, fan_in, fan_out):
        kw, kb = jax.random.split(key)
        bound = 1.0 / jnp.sqrt(fan_in)
        w = jax.random.uniform(kw, (fan_out, fan_in), jnp.float32, -bound, bound)
        b = jax.random.uniform(kb, (fan_out,), jnp.float32, -bound, bound)
        return w, b

    k1, k2, k3 = jax.random.split(key, 3)
    w1, b1 = linear(k1, N_IN, H1)
    w2, b2 = linear(k2, H1, H2)
    w3, b3 = linear(k3, H2, N_OUT)
    return (w1, b1, w2, b2, w3, b3)


def reference_forward(x, params):
    """Pure-JAX reference identical to the PyTorch forward."""
    w1, b1, w2, b2, w3, b3 = params
    h = jnp.maximum(x @ w1.T + b1, 0.0)
    h = jnp.maximum(h @ w2.T + b2, 0.0)
    return h @ w3.T + b3


if __name__ == "__main__":
    key = jax.random.PRNGKey(0)
    kx1, kx2, kp = jax.random.split(key, 3)
    params = init_params(kp)

    # Small single-tile case (B=8 -> padded to one (7,8,128) tile, grid=(1,)).
    x_small = jax.random.normal(kx1, (8, N_IN), jnp.float32)
    out_small = jax.block_until_ready(net_7_2_forward(x_small, params))
    ref_small = reference_forward(x_small, params)
    assert out_small.shape == (8, N_OUT)
    assert jnp.allclose(out_small, ref_small, atol=1e-5, rtol=1e-5), "small mismatch"

    # Multi-step case: B=2000 -> R=16, TR=8, grid=(2,) -> exercises padding,
    # the pipelined grid and the "parallel" axis.
    x_big = jax.random.normal(kx2, (2000, N_IN), jnp.float32)
    out_big = jax.block_until_ready(net_7_2_forward(x_big, params))
    ref_big = reference_forward(x_big, params)
    assert out_big.shape == (2000, N_OUT)
    assert jnp.allclose(out_big, ref_big, atol=1e-5, rtol=1e-5), "big mismatch"

    # bf16-streaming path (halved HBM bytes; compute stays f32): loose tolerance.
    out_bf16 = jax.block_until_ready(
        net_7_2_forward(x_big, params, io_dtype=jnp.bfloat16))
    assert jnp.allclose(out_bf16.astype(jnp.float32), ref_big,
                        atol=5e-2, rtol=5e-2), "bf16 mismatch"

    # Feature-major entry point (no wrapper transposes).
    out_fm = jax.block_until_ready(net_7_2_forward_fm(jnp.transpose(x_big), params))
    assert jnp.allclose(jnp.transpose(out_fm), ref_big, atol=1e-5, rtol=1e-5), \
        "feature-major mismatch"

    print("KERNEL_OK")
</pallas_src>

<mosaic_0001>
module attributes {stable_mosaic.version = 11 : i64} {
  func.func @mlp_kernel(%arg0: i32, %arg1: memref<7x8x128xf32, #tpu.memory_space<vmem>>, %arg2: memref<48xf32, #tpu.memory_space<smem>>, %arg3: memref<2x8x128xf32, #tpu.memory_space<vmem>>) attributes {dimension_semantics = [#tpu.dimension_semantics<parallel>], iteration_bounds = array<i64: 1>, scalar_prefetch = 0 : i64, scratch_operands = 0 : i64, tpu.core_type = #tpu.core_type<tc>, window_params = [{transform_indices = @transform_0, window_bounds = array<i64: 7, 8, 128>}, {transform_indices = @transform_1, window_bounds = array<i64: 48>}, {transform_indices = @transform_2, window_bounds = array<i64: 2, 8, 128>}]} {
    %c0 = arith.constant 0 : index
    %c0_0 = arith.constant 0 : index
    %c0_1 = arith.constant 0 : index
    %0 = vector.load %arg1[%c0, %c0_0, %c0_1] : memref<7x8x128xf32, #tpu.memory_space<vmem>>, vector<1x8x128xf32>
    %1 = vector.shape_cast %0 : vector<1x8x128xf32> to vector<8x128xf32>
    %c1 = arith.constant 1 : index
    %c0_2 = arith.constant 0 : index
    %c0_3 = arith.constant 0 : index
    %2 = vector.load %arg1[%c1, %c0_2, %c0_3] : memref<7x8x128xf32, #tpu.memory_space<vmem>>, vector<1x8x128xf32>
    %3 = vector.shape_cast %2 : vector<1x8x128xf32> to vector<8x128xf32>
    %c2 = arith.constant 2 : index
    %c0_4 = arith.constant 0 : index
    %c0_5 = arith.constant 0 : index
    %4 = vector.load %arg1[%c2, %c0_4, %c0_5] : memref<7x8x128xf32, #tpu.memory_space<vmem>>, vector<1x8x128xf32>
    %5 = vector.shape_cast %4 : vector<1x8x128xf32> to vector<8x128xf32>
    %c3 = arith.constant 3 : index
    %c0_6 = arith.constant 0 : index
    %c0_7 = arith.constant 0 : index
    %6 = vector.load %arg1[%c3, %c0_6, %c0_7] : memref<7x8x128xf32, #tpu.memory_space<vmem>>, vector<1x8x128xf32>
    %7 = vector.shape_cast %6 : vector<1x8x128xf32> to vector<8x128xf32>
    %c4 = arith.constant 4 : index
    %c0_8 = arith.constant 0 : index
    %c0_9 = arith.constant 0 : index
    %8 = vector.load %arg1[%c4, %c0_8, %c0_9] : memref<7x8x128xf32, #tpu.memory_space<vmem>>, vector<1x8x128xf32>
    %9 = vector.shape_cast %8 : vector<1x8x128xf32> to vector<8x128xf32>
    %c5 = arith.constant 5 : index
    %c0_10 = arith.constant 0 : index
    %c0_11 = arith.constant 0 : index
    %10 = vector.load %arg1[%c5, %c0_10, %c0_11] : memref<7x8x128xf32, #tpu.memory_space<vmem>>, vector<1x8x128xf32>
    %11 = vector.shape_cast %10 : vector<1x8x128xf32> to vector<8x128xf32>
    %c6 = arith.constant 6 : index
    %c0_12 = arith.constant 0 : index
    %c0_13 = arith.constant 0 : index
    %12 = vector.load %arg1[%c6, %c0_12, %c0_13] : memref<7x8x128xf32, #tpu.memory_space<vmem>>, vector<1x8x128xf32>
    %13 = vector.shape_cast %12 : vector<1x8x128xf32> to vector<8x128xf32>
    %c0_14 = arith.constant 0 : index
    %14 = memref.load %arg2[%c0_14] : memref<48xf32, #tpu.memory_space<smem>>
    %15 = vector.broadcast %14 : f32 to vector<8x128xf32>
    %16 = arith.mulf %1, %15 : vector<8x128xf32>
    %c1_15 = arith.constant 1 : index
    %17 = memref.load %arg2[%c1_15] : memref<48xf32, #tpu.memory_space<smem>>
    %18 = vector.broadcast %17 : f32 to vector<8x128xf32>
    %19 = arith.mulf %3, %18 : vector<8x128xf32>
    %20 = arith.addf %16, %19 : vector<8x128xf32>
    %c2_16 = arith.constant 2 : index
    %21 = memref.load %arg2[%c2_16] : memref<48xf32, #tpu.memory_space<smem>>
    %22 = vector.broadcast %21 : f32 to vector<8x128xf32>
    %23 = arith.mulf %5, %22 : vector<8x128xf32>
    %24 = arith.addf %20, %23 : vector<8x128xf32>
    %c3_17 = arith.constant 3 : index
    %25 = memref.load %arg2[%c3_17] : memref<48xf32, #tpu.memory_space<smem>>
    %26 = vector.broadcast %25 : f32 to vector<8x128xf32>
    %27 = arith.mulf %7, %26 : vector<8x128xf32>
    %28 = arith.addf %24, %27 : vector<8x128xf32>
    %c4_18 = arith.constant 4 : index
    %29 = memref.load %arg2[%c4_18] : memref<48xf32, #tpu.memory_space<smem>>
    %30 = vector.broadcast %29 : f32 to vector<8x128xf32>
    %31 = arith.mulf %9, %30 : vector<8x128xf32>
    %32 = arith.addf %28, %31 : vector<8x128xf32>
    %c5_19 = arith.constant 5 : index
    %33 = memref.load %arg2[%c5_19] : memref<48xf32, #tpu.memory_space<smem>>
    %34 = vector.broadcast %33 : f32 to vector<8x128xf32>
    %35 = arith.mulf %11, %34 : vector<8x128xf32>
    %36 = arith.addf %32, %35 : vector<8x128xf32>
    %c6_20 = arith.constant 6 : index
    %37 = memref.load %arg2[%c6_20] : memref<48xf32, #tpu.memory_space<smem>>
    %38 = vector.broadcast %37 : f32 to vector<8x128xf32>
    %39 = arith.mulf %13, %38 : vector<8x128xf32>
    %40 = arith.addf %36, %39 : vector<8x128xf32>
    %c28 = arith.constant 28 : index
    %41 = memref.load %arg2[%c28] : memref<48xf32, #tpu.memory_space<smem>>
    %42 = vector.broadcast %41 : f32 to vector<8x128xf32>
    %43 = arith.addf %40, %42 : vector<8x128xf32>
    %cst = arith.constant 0.000000e+00 : f32
    %44 = vector.broadcast %cst : f32 to vector<8x128xf32>
    %45 = arith.maximumf %43, %44 : vector<8x128xf32>
    %c7 = arith.constant 7 : index
    %46 = memref.load %arg2[%c7] : memref<48xf32, #tpu.memory_space<smem>>
    %47 = vector.broadcast %46 : f32 to vector<8x128xf32>
    %48 = arith.mulf %1, %47 : vector<8x128xf32>
    %c8 = arith.constant 8 : index
    %49 = memref.load %arg2[%c8] : memref<48xf32, #tpu.memory_space<smem>>
    %50 = vector.broadcast %49 : f32 to vector<8x128xf32>
    %51 = arith.mulf %3, %50 : vector<8x128xf32>
    %52 = arith.addf %48, %51 : vector<8x128xf32>
    %c9 = arith.constant 9 : index
    %53 = memref.load %arg2[%c9] : memref<48xf32, #tpu.memory_space<smem>>
    %54 = vector.broadcast %53 : f32 to vector<8x128xf32>
    %55 = arith.mulf %5, %54 : vector<8x128xf32>
    %56 = arith.addf %52, %55 : vector<8x128xf32>
    %c10 = arith.constant 10 : index
    %57 = memref.load %arg2[%c10] : memref<48xf32, #tpu.memory_space<smem>>
    %58 = vector.broadcast %57 : f32 to vector<8x128xf32>
    %59 = arith.mulf %7, %58 : vector<8x128xf32>
    %60 = arith.addf %56, %59 : vector<8x128xf32>
    %c11 = arith.constant 11 : index
    %61 = memref.load %arg2[%c11] : memref<48xf32, #tpu.memory_space<smem>>
    %62 = vector.broadcast %61 : f32 to vector<8x128xf32>
    %63 = arith.mulf %9, %62 : vector<8x128xf32>
    %64 = arith.addf %60, %63 : vector<8x128xf32>
    %c12 = arith.constant 12 : index
    %65 = memref.load %arg2[%c12] : memref<48xf32, #tpu.memory_space<smem>>
    %66 = vector.broadcast %65 : f32 to vector<8x128xf32>
    %67 = arith.mulf %11, %66 : vector<8x128xf32>
    %68 = arith.addf %64, %67 : vector<8x128xf32>
    %c13 = arith.constant 13 : index
    %69 = memref.load %arg2[%c13] : memref<48xf32, #tpu.memory_space<smem>>
    %70 = vector.broadcast %69 : f32 to vector<8x128xf32>
    %71 = arith.mulf %13, %70 : vector<8x128xf32>
    %72 = arith.addf %68, %71 : vector<8x128xf32>
    %c29 = arith.constant 29 : index
    %73 = memref.load %arg2[%c29] : memref<48xf32, #tpu.memory_space<smem>>
    %74 = vector.broadcast %73 : f32 to vector<8x128xf32>
    %75 = arith.addf %72, %74 : vector<8x128xf32>
    %cst_21 = arith.constant 0.000000e+00 : f32
    %76 = vector.broadcast %cst_21 : f32 to vector<8x128xf32>
    %77 = arith.maximumf %75, %76 : vector<8x128xf32>
    %c14 = arith.constant 14 : index
    %78 = memref.load %arg2[%c14] : memref<48xf32, #tpu.memory_space<smem>>
    %79 = vector.broadcast %78 : f32 to vector<8x128xf32>
    %80 = arith.mulf %1, %79 : vector<8x128xf32>
    %c15 = arith.constant 15 : index
    %81 = memref.load %arg2[%c15] : memref<48xf32, #tpu.memory_space<smem>>
    %82 = vector.broadcast %81 : f32 to vector<8x128xf32>
    %83 = arith.mulf %3, %82 : vector<8x128xf32>
    %84 = arith.addf %80, %83 : vector<8x128xf32>
    %c16 = arith.constant 16 : index
    %85 = memref.load %arg2[%c16] : memref<48xf32, #tpu.memory_space<smem>>
    %86 = vector.broadcast %85 : f32 to vector<8x128xf32>
    %87 = arith.mulf %5, %86 : vector<8x128xf32>
    %88 = arith.addf %84, %87 : vector<8x128xf32>
    %c17 = arith.constant 17 : index
    %89 = memref.load %arg2[%c17] : memref<48xf32, #tpu.memory_space<smem>>
    %90 = vector.broadcast %89 : f32 to vector<8x128xf32>
    %91 = arith.mulf %7, %90 : vector<8x128xf32>
    %92 = arith.addf %88, %91 : vector<8x128xf32>
    %c18 = arith.constant 18 : index
    %93 = memref.load %arg2[%c18] : memref<48xf32, #tpu.memory_space<smem>>
    %94 = vector.broadcast %93 : f32 to vector<8x128xf32>
    %95 = arith.mulf %9, %94 : vector<8x128xf32>
    %96 = arith.addf %92, %95 : vector<8x128xf32>
    %c19 = arith.constant 19 : index
    %97 = memref.load %arg2[%c19] : memref<48xf32, #tpu.memory_space<smem>>
    %98 = vector.broadcast %97 : f32 to vector<8x128xf32>
    %99 = arith.mulf %11, %98 : vector<8x128xf32>
    %100 = arith.addf %96, %99 : vector<8x128xf32>
    %c20 = arith.constant 20 : index
    %101 = memref.load %arg2[%c20] : memref<48xf32, #tpu.memory_space<smem>>
    %102 = vector.broadcast %101 : f32 to vector<8x128xf32>
    %103 = arith.mulf %13, %102 : vector<8x128xf32>
    %104 = arith.addf %100, %103 : vector<8x128xf32>
    %c30 = arith.constant 30 : index
    %105 = memref.load %arg2[%c30] : memref<48xf32, #tpu.memory_space<smem>>
    %106 = vector.broadcast %105 : f32 to vector<8x128xf32>
    %107 = arith.addf %104, %106 : vector<8x128xf32>
    %cst_22 = arith.constant 0.000000e+00 : f32
    %108 = vector.broadcast %cst_22 : f32 to vector<8x128xf32>
    %109 = arith.maximumf %107, %108 : vector<8x128xf32>
    %c21 = arith.constant 21 : index
    %110 = memref.load %arg2[%c21] : memref<48xf32, #tpu.memory_space<smem>>
    %111 = vector.broadcast %110 : f32 to vector<8x128xf32>
    %112 = arith.mulf %1, %111 : vector<8x128xf32>
    %c22 = arith.constant 22 : index
    %113 = memref.load %arg2[%c22] : memref<48xf32, #tpu.memory_space<smem>>
    %114 = vector.broadcast %113 : f32 to vector<8x128xf32>
    %115 = arith.mulf %3, %114 : vector<8x128xf32>
    %116 = arith.addf %112, %115 : vector<8x128xf32>
    %c23 = arith.constant 23 : index
    %117 = memref.load %arg2[%c23] : memref<48xf32, #tpu.memory_space<smem>>
    %118 = vector.broadcast %117 : f32 to vector<8x128xf32>
    %119 = arith.mulf %5, %118 : vector<8x128xf32>
    %120 = arith.addf %116, %119 : vector<8x128xf32>
    %c24 = arith.constant 24 : index
    %121 = memref.load %arg2[%c24] : memref<48xf32, #tpu.memory_space<smem>>
    %122 = vector.broadcast %121 : f32 to vector<8x128xf32>
    %123 = arith.mulf %7, %122 : vector<8x128xf32>
    %124 = arith.addf %120, %123 : vector<8x128xf32>
    %c25 = arith.constant 25 : index
    %125 = memref.load %arg2[%c25] : memref<48xf32, #tpu.memory_space<smem>>
    %126 = vector.broadcast %125 : f32 to vector<8x128xf32>
    %127 = arith.mulf %9, %126 : vector<8x128xf32>
    %128 = arith.addf %124, %127 : vector<8x128xf32>
    %c26 = arith.constant 26 : index
    %129 = memref.load %arg2[%c26] : memref<48xf32, #tpu.memory_space<smem>>
    %130 = vector.broadcast %129 : f32 to vector<8x128xf32>
    %131 = arith.mulf %11, %130 : vector<8x128xf32>
    %132 = arith.addf %128, %131 : vector<8x128xf32>
    %c27 = arith.constant 27 : index
    %133 = memref.load %arg2[%c27] : memref<48xf32, #tpu.memory_space<smem>>
    %134 = vector.broadcast %133 : f32 to vector<8x128xf32>
    %135 = arith.mulf %13, %134 : vector<8x128xf32>
    %136 = arith.addf %132, %135 : vector<8x128xf32>
    %c31 = arith.constant 31 : index
    %137 = memref.load %arg2[%c31] : memref<48xf32, #tpu.memory_space<smem>>
    %138 = vector.broadcast %137 : f32 to vector<8x128xf32>
    %139 = arith.addf %136, %138 : vector<8x128xf32>
    %cst_23 = arith.constant 0.000000e+00 : f32
    %140 = vector.broadcast %cst_23 : f32 to vector<8x128xf32>
    %141 = arith.maximumf %139, %140 : vector<8x128xf32>
    %c32 = arith.constant 32 : index
    %142 = memref.load %arg2[%c32] : memref<48xf32, #tpu.memory_space<smem>>
    %143 = vector.broadcast %142 : f32 to vector<8x128xf32>
    %144 = arith.mulf %45, %143 : vector<8x128xf32>
    %c33 = arith.constant 33 : index
    %145 = memref.load %arg2[%c33] : memref<48xf32, #tpu.memory_space<smem>>
    %146 = vector.broadcast %145 : f32 to vector<8x128xf32>
    %147 = arith.mulf %77, %146 : vector<8x128xf32>
    %148 = arith.addf %144, %147 : vector<8x128xf32>
    %c34 = arith.constant 34 : index
    %149 = memref.load %arg2[%c34] : memref<48xf32, #tpu.memory_space<smem>>
    %150 = vector.broadcast %149 : f32 to vector<8x128xf32>
    %151 = arith.mulf %109, %150 : vector<8x128xf32>
    %152 = arith.addf %148, %151 : vector<8x128xf32>
    %c35 = arith.constant 35 : index
    %153 = memref.load %arg2[%c35] : memref<48xf32, #tpu.memory_space<smem>>
    %154 = vector.broadcast %153 : f32 to vector<8x128xf32>
    %155 = arith.mulf %141, %154 : vector<8x128xf32>
    %156 = arith.addf %152, %155 : vector<8x128xf32>
    %c40 = arith.constant 40 : index
    %157 = memref.load %arg2[%c40] : memref<48xf32, #tpu.memory_space<smem>>
    %158 = vector.broadcast %157 : f32 to vector<8x128xf32>
    %159 = arith.addf %156, %158 : vector<8x128xf32>
    %cst_24 = arith.constant 0.000000e+00 : f32
    %160 = vector.broadcast %cst_24 : f32 to vector<8x128xf32>
    %161 = arith.maximumf %159, %160 : vector<8x128xf32>
    %c36 = arith.constant 36 : index
    %162 = memref.load %arg2[%c36] : memref<48xf32, #tpu.memory_space<smem>>
    %163 = vector.broadcast %162 : f32 to vector<8x128xf32>
    %164 = arith.mulf %45, %163 : vector<8x128xf32>
    %c37 = arith.constant 37 : index
    %165 = memref.load %arg2[%c37] : memref<48xf32, #tpu.memory_space<smem>>
    %166 = vector.broadcast %165 : f32 to vector<8x128xf32>
    %167 = arith.mulf %77, %166 : vector<8x128xf32>
    %168 = arith.addf %164, %167 : vector<8x128xf32>
    %c38 = arith.constant 38 : index
    %169 = memref.load %arg2[%c38] : memref<48xf32, #tpu.memory_space<smem>>
    %170 = vector.broadcast %169 : f32 to vector<8x128xf32>
    %171 = arith.mulf %109, %170 : vector<8x128xf32>
    %172 = arith.addf %168, %171 : vector<8x128xf32>
    %c39 = arith.constant 39 : index
    %173 = memref.load %arg2[%c39] : memref<48xf32, #tpu.memory_space<smem>>
    %174 = vector.broadcast %173 : f32 to vector<8x128xf32>
    %175 = arith.mulf %141, %174 : vector<8x128xf32>
    %176 = arith.addf %172, %175 : vector<8x128xf32>
    %c41 = arith.constant 41 : index
    %177 = memref.load %arg2[%c41] : memref<48xf32, #tpu.memory_space<smem>>
    %178 = vector.broadcast %177 : f32 to vector<8x128xf32>
    %179 = arith.addf %176, %178 : vector<8x128xf32>
    %cst_25 = arith.constant 0.000000e+00 : f32
    %180 = vector.broadcast %cst_25 : f32 to vector<8x128xf32>
    %181 = arith.maximumf %179, %180 : vector<8x128xf32>
    %c42 = arith.constant 42 : index
    %182 = memref.load %arg2[%c42] : memref<48xf32, #tpu.memory_space<smem>>
    %183 = vector.broadcast %182 : f32 to vector<8x128xf32>
    %184 = arith.mulf %161, %183 : vector<8x128xf32>
    %c43 = arith.constant 43 : index
    %185 = memref.load %arg2[%c43] : memref<48xf32, #tpu.memory_space<smem>>
    %186 = vector.broadcast %185 : f32 to vector<8x128xf32>
    %187 = arith.mulf %181, %186 : vector<8x128xf32>
    %188 = arith.addf %184, %187 : vector<8x128xf32>
    %c46 = arith.constant 46 : index
    %189 = memref.load %arg2[%c46] : memref<48xf32, #tpu.memory_space<smem>>
    %190 = vector.broadcast %189 : f32 to vector<8x128xf32>
    %191 = arith.addf %188, %190 : vector<8x128xf32>
    %c0_26 = arith.constant 0 : index
    %c0_27 = arith.constant 0 : index
    %c0_28 = arith.constant 0 : index
    %192 = vector.load %arg3[%c0_26, %c0_27, %c0_28] : memref<2x8x128xf32, #tpu.memory_space<vmem>>, vector<1x8x128xf32>
    %193 = vector.shape_cast %192 : vector<1x8x128xf32> to vector<8x128xf32>
    %194 = vector.shape_cast %191 : vector<8x128xf32> to vector<1x8x128xf32>
    tpu.vector_store %arg3[%c0_26, %c0_27, %c0_28], %194 {strides = array<i32>} : memref<2x8x128xf32, #tpu.memory_space<vmem>>, vector<1x8x128xf32>,
    %c44 = arith.constant 44 : index
    %195 = memref.load %arg2[%c44] : memref<48xf32, #tpu.memory_space<smem>>
    %196 = vector.broadcast %195 : f32 to vector<8x128xf32>
    %197 = arith.mulf %161, %196 : vector<8x128xf32>
    %c45 = arith.constant 45 : index
    %198 = memref.load %arg2[%c45] : memref<48xf32, #tpu.memory_space<smem>>
    %199 = vector.broadcast %198 : f32 to vector<8x128xf32>
    %200 = arith.mulf %181, %199 : vector<8x128xf32>
    %201 = arith.addf %197, %200 : vector<8x128xf32>
    %c47 = arith.constant 47 : index
    %202 = memref.load %arg2[%c47] : memref<48xf32, #tpu.memory_space<smem>>
    %203 = vector.broadcast %202 : f32 to vector<8x128xf32>
    %204 = arith.addf %201, %203 : vector<8x128xf32>
    %c1_29 = arith.constant 1 : index
    %c0_30 = arith.constant 0 : index
    %c0_31 = arith.constant 0 : index
    %205 = vector.load %arg3[%c1_29, %c0_30, %c0_31] : memref<2x8x128xf32, #tpu.memory_space<vmem>>, vector<1x8x128xf32>
    %206 = vector.shape_cast %205 : vector<1x8x128xf32> to vector<8x128xf32>
    %207 = vector.shape_cast %204 : vector<8x128xf32> to vector<1x8x128xf32>
    tpu.vector_store %arg3[%c1_29, %c0_30, %c0_31], %207 {strides = array<i32>} : memref<2x8x128xf32, #tpu.memory_space<vmem>>, vector<1x8x128xf32>,
    return
  }
  func.func @transform_0(%arg0: i32) -> (i32, i32, i32) {
    %c0_i32 = arith.constant 0 : i32
    %c0_i32_0 = arith.constant 0 : i32
    %c0_i32_1 = arith.constant 0 : i32
    return %c0_i32, %arg0, %c0_i32_0 : i32, i32, i32
  }
  func.func @transform_1(%arg0: i32) -> i32 {
    %c0_i32 = arith.constant 0 : i32
    %c0_i32_0 = arith.constant 0 : i32
    return %c0_i32 : i32
  }
  func.func @transform_2(%arg0: i32) -> (i32, i32, i32) {
    %c0_i32 = arith.constant 0 : i32
    %c0_i32_0 = arith.constant 0 : i32
    %c0_i32_1 = arith.constant 0 : i32
    return %c0_i32, %arg0, %c0_i32_0 : i32, i32, i32
  }
}

</mosaic_0001>

<llo_original>
// kernel: tpu_custom_call.1
$region0: #{tpu_custom_call.1}
  #allocation0 [shape = 'u32[]', space=smem, size = 0x4, offset = 0x4, fixed_abs, tag = 'smem constant byte address 0x4 - core index']
  #allocation1 [shape = 'u32[144,128]{1,0:T(1,128)}', space=vmem, size = 0x12000, scoped, tag = 'internal scratch']
  %s0 = inlined_call_operand.hbm [shape: f32[7,8,128], index: 0, kind: input, shape index: {}]
  %s1 = inlined_call_operand.vmem [shape: f32[48], index: 1, kind: input, shape index: {}]
  %s2 = inlined_call_operand.hbm [shape: f32[2,8,128], index: 2, kind: output, shape index: {}]
  %s3 = sld [smem:[#allocation0]]
  $region26: #{tpu_custom_call.1} parent=0
    _
  %s5 = ssub.s32 1, %s3
  %s6 = scalar_select 0, %s5, %s3
  $region1: #{tpu_custom_call.1} parent=0
    #allocation2 [shape = 'u8[28672]{0}', space=vmem, size = 0x7000, scoped, tag = 'input window, operand 0, single buffered']
    #allocation3 [shape = 's32[1]{0}', space=sflag, size = 0x4, scoped, tag = 'scoped memory for tpu_custom_call.1']
    #allocation4 [shape = 's32[1]{0}', space=sflag, size = 0x4, scoped, tag = 'scoped memory for tpu_custom_call.1']
    #allocation5 [shape = 's32[1]{0}', space=sflag, size = 0x4, scoped, tag = 'scoped memory for tpu_custom_call.1']
    #allocation6 [shape = 'u8[512]{0}', space=smem, size = 0x200, scoped, tag = 'input window, operand 1, single buffered']
    #allocation7 [shape = 'u8[8192]{0}', space=vmem, size = 0x2000, scoped, tag = 'output window, operand 0, single buffered']
    %7 = vsyncpa [#allocation3], 0
    %8 = vsyncpa [#allocation5], 0
    %9 = vsyncpa [#allocation4], 0
    // Predicated region
    $region2: #{tpu_custom_call.1} parent=1 // pred_check
      _
    $region3: #{tpu_custom_call.1} parent=1 // pred_check_branch
      %11 = sbr.rel (0) target = $region5
    $region4: #{tpu_custom_call.1} parent=1 // pred_region
      %s13 = ssub.s32 896, 896
      %14 = vsyncadd [#allocation3], %s13
      %s15 = sshll.u32 [#allocation2], 4
      %s16 = int_to_ptr.vmem [resolvable:$true] %s15
      %21 = dma.hbm_to_vmem [thread:$0]  %s0, 896, %s16, [#allocation3], 128, 128, 8
    $region5: #{tpu_custom_call.1} parent=1 // pred_fallthru
      _
    // Predicated region
    $region6: #{tpu_custom_call.1} parent=1 // pred_check
      _
    $region7: #{tpu_custom_call.1} parent=1 // pred_check_branch
      %23 = sbr.rel (0) target = $region9
    $region8: #{tpu_custom_call.1} parent=1 // pred_region
      %s25 = ssub.s32 16, 16
      %26 = vsyncadd [#allocation5], %s25
      %s28 = sshll.u32 %s1, 4
      %s29 = int_to_ptr.vmem [resolvable:$true] %s28
      %31 = dma.vmem_to_smem %s29, 16, [#allocation6], [#allocation5]
    $region9: #{tpu_custom_call.1} parent=1 // pred_fallthru
      _
    // Predicated region
    $region10: #{tpu_custom_call.1} parent=1 // pred_check
      _
    $region11: #{tpu_custom_call.1} parent=1 // pred_check_branch
      %33 = sbr.rel (0) target = $region13
    $region12: #{tpu_custom_call.1} parent=1 // pred_region
      %34 = dma.done [#allocation3], 896
    $region13: #{tpu_custom_call.1} parent=1 // pred_fallthru
      _
    // Predicated region
    $region14: #{tpu_custom_call.1} parent=1 // pred_check
      _
    $region15: #{tpu_custom_call.1} parent=1 // pred_check_branch
      %36 = sbr.rel (0) target = $region17
    $region16: #{tpu_custom_call.1} parent=1 // pred_region
      %37 = dma.done [#allocation5], 16
    $region17: #{tpu_custom_call.1} parent=1 // pred_fallthru
      _
    %38 = sfence
    %v39 = vld [vmem:[#allocation2] sm:$0xff]
    %s40 = scalar_lea.vmem [#allocation2], 8
    %v41 = vld [vmem:[%s40] sm:$0xff]
    %s42 = scalar_lea.vmem [#allocation2], 16
    %v43 = vld [vmem:[%s42] sm:$0xff]
    %s44 = scalar_lea.vmem [#allocation2], 24
    %v45 = vld [vmem:[%s44] sm:$0xff]
    %s46 = scalar_lea.vmem [#allocation2], 32
    %v47 = vld [vmem:[%s46] sm:$0xff]
    %s48 = scalar_lea.vmem [#allocation2], 40
    %v49 = vld [vmem:[%s48] sm:$0xff]
    %s50 = scalar_lea.vmem [#allocation2], 48
    %v51 = vld [vmem:[%s50] sm:$0xff]
    %s52 = sld [smem:[#allocation6]]
    %v53 = vstv %s52
    %v54 = vmul.f32 %v39, %v53
    %s55 = sld [smem:[#allocation6 + $0x1]]
    %v56 = vstv %s55
    %v57 = vmul.f32 %v41, %v56
    %v58 = vadd.f32 %v54, %v57
    %s59 = sld [smem:[#allocation6 + $0x2]]
    %v60 = vstv %s59
    %v61 = vmul.f32 %v43, %v60
    %v62 = vadd.f32 %v58, %v61
    %s63 = sld [smem:[#allocation6 + $0x3]]
    %v64 = vstv %s63
    %v65 = vmul.f32 %v45, %v64
    %v66 = vadd.f32 %v62, %v65
    %s67 = sld [smem:[#allocation6 + $0x4]]
    %v68 = vstv %s67
    %v69 = vmul.f32 %v47, %v68
    %v70 = vadd.f32 %v66, %v69
    %s71 = sld [smem:[#allocation6 + $0x5]]
    %v72 = vstv %s71
    %v73 = vmul.f32 %v49, %v72
    %v74 = vadd.f32 %v70, %v73
    %s75 = sld [smem:[#allocation6 + $0x6]]
    %v76 = vstv %s75
    %v77 = vmul.f32 %v51, %v76
    %v78 = vadd.f32 %v74, %v77
    %s79 = sld [smem:[#allocation6 + $0x1c]]
    %v80 = vstv %s79
    %v81 = vadd.f32 %v78, %v80
    %v82 = vmax.f32 %v81, 0.0
    %s83 = sld [smem:[#allocation6 + $0x7]]
    %v84 = vstv %s83
    %v85 = vmul.f32 %v39, %v84
    %s86 = sld [smem:[#allocation6 + $0x8]]
    %v87 = vstv %s86
    %v88 = vmul.f32 %v41, %v87
    %v89 = vadd.f32 %v85, %v88
    %s90 = sld [smem:[#allocation6 + $0x9]]
    %v91 = vstv %s90
    %v92 = vmul.f32 %v43, %v91
    %v93 = vadd.f32 %v89, %v92
    %s94 = sld [smem:[#allocation6 + $0xa]]
    %v95 = vstv %s94
    %v96 = vmul.f32 %v45, %v95
    %v97 = vadd.f32 %v93, %v96
    %s98 = sld [smem:[#allocation6 + $0xb]]
    %v99 = vstv %s98
    %v100 = vmul.f32 %v47, %v99
    %v101 = vadd.f32 %v97, %v100
    %s102 = sld [smem:[#allocation6 + $0xc]]
    %v103 = vstv %s102
    %v104 = vmul.f32 %v49, %v103
    %v105 = vadd.f32 %v101, %v104
    %s106 = sld [smem:[#allocation6 + $0xd]]
    %v107 = vstv %s106
    %v108 = vmul.f32 %v51, %v107
    %v109 = vadd.f32 %v105, %v108
    %s110 = sld [smem:[#allocation6 + $0x1d]]
    %v111 = vstv %s110
    %v112 = vadd.f32 %v109, %v111
    %v113 = vmax.f32 %v112, 0.0
    %s114 = sld [smem:[#allocation6 + $0xe]]
    %v115 = vstv %s114
    %v116 = vmul.f32 %v39, %v115
    %s117 = sld [smem:[#allocation6 + $0xf]]
    %v118 = vstv %s117
    %v119 = vmul.f32 %v41, %v118
    %v120 = vadd.f32 %v116, %v119
    %s121 = sld [smem:[#allocation6 + $0x10]]
    %v122 = vstv %s121
    %v123 = vmul.f32 %v43, %v122
    %v124 = vadd.f32 %v120, %v123
    %s125 = sld [smem:[#allocation6 + $0x11]]
    %v126 = vstv %s125
    %v127 = vmul.f32 %v45, %v126
    %v128 = vadd.f32 %v124, %v127
    %s129 = sld [smem:[#allocation6 + $0x12]]
    %v130 = vstv %s129
    %v131 = vmul.f32 %v47, %v130
    %v132 = vadd.f32 %v128, %v131
    %s133 = sld [smem:[#allocation6 + $0x13]]
    %v134 = vstv %s133
    %v135 = vmul.f32 %v49, %v134
    %v136 = vadd.f32 %v132, %v135
    %s137 = sld [smem:[#allocation6 + $0x14]]
    %v138 = vstv %s137
    %v139 = vmul.f32 %v51, %v138
    %v140 = vadd.f32 %v136, %v139
    %s141 = sld [smem:[#allocation6 + $0x1e]]
    %v142 = vstv %s141
    %v143 = vadd.f32 %v140, %v142
    %v144 = vmax.f32 %v143, 0.0
    %s145 = sld [smem:[#allocation6 + $0x15]]
    %v146 = vstv %s145
    %v147 = vmul.f32 %v39, %v146
    %s148 = sld [smem:[#allocation6 + $0x16]]
    %v149 = vstv %s148
    %v150 = vmul.f32 %v41, %v149
    %v151 = vadd.f32 %v147, %v150
    %s152 = sld [smem:[#allocation6 + $0x17]]
    %v153 = vstv %s152
    %v154 = vmul.f32 %v43, %v153
    %v155 = vadd.f32 %v151, %v154
    %s156 = sld [smem:[#allocation6 + $0x18]]
    %v157 = vstv %s156
    %v158 = vmul.f32 %v45, %v157
    %v159 = vadd.f32 %v155, %v158
    %s160 = sld [smem:[#allocation6 + $0x19]]
    %v161 = vstv %s160
    %v162 = vmul.f32 %v47, %v161
    %v163 = vadd.f32 %v159, %v162
    %s164 = sld [smem:[#allocation6 + $0x1a]]
    %v165 = vstv %s164
    %v166 = vmul.f32 %v49, %v165
    %v167 = vadd.f32 %v163, %v166
    %s168 = sld [smem:[#allocation6 + $0x1b]]
    %v169 = vstv %s168
    %v170 = vmul.f32 %v51, %v169
    %v171 = vadd.f32 %v167, %v170
    %s172 = sld [smem:[#allocation6 + $0x1f]]
    %v173 = vstv %s172
    %v174 = vadd.f32 %v171, %v173
    %v175 = vmax.f32 %v174, 0.0
    %s176 = sld [smem:[#allocation6 + $0x20]]
    %v177 = vstv %s176
    %v178 = vmul.f32 %v82, %v177
    %s179 = sld [smem:[#allocation6 + $0x21]]
    %v180 = vstv %s179
    %v181 = vmul.f32 %v113, %v180
    %v182 = vadd.f32 %v178, %v181
    %s183 = sld [smem:[#allocation6 + $0x22]]
    %v184 = vstv %s183
    %v185 = vmul.f32 %v144, %v184
    %v186 = vadd.f32 %v182, %v185
    %s187 = sld [smem:[#allocation6 + $0x23]]
    %v188 = vstv %s187
    %v189 = vmul.f32 %v175, %v188
    %v190 = vadd.f32 %v186, %v189
    %s191 = sld [smem:[#allocation6 + $0x28]]
    %v192 = vstv %s191
    %v193 = vadd.f32 %v190, %v192
    %v194 = vmax.f32 %v193, 0.0
    %s195 = sld [smem:[#allocation6 + $0x24]]
    %v196 = vstv %s195
    %v197 = vmul.f32 %v82, %v196
    %s198 = sld [smem:[#allocation6 + $0x25]]
    %v199 = vstv %s198
    %v200 = vmul.f32 %v113, %v199
    %v201 = vadd.f32 %v197, %v200
    %s202 = sld [smem:[#allocation6 + $0x26]]
    %v203 = vstv %s202
    %v204 = vmul.f32 %v144, %v203
    %v205 = vadd.f32 %v201, %v204
    %s206 = sld [smem:[#allocation6 + $0x27]]
    %v207 = vstv %s206
    %v208 = vmul.f32 %v175, %v207
    %v209 = vadd.f32 %v205, %v208
    %s210 = sld [smem:[#allocation6 + $0x29]]
    %v211 = vstv %s210
    %v212 = vadd.f32 %v209, %v211
    %v213 = vmax.f32 %v212, 0.0
    %s214 = sld [smem:[#allocation6 + $0x2a]]
    %v215 = vstv %s214
    %v216 = vmul.f32 %v194, %v215
    %s217 = sld [smem:[#allocation6 + $0x2b]]
    %v218 = vstv %s217
    %v219 = vmul.f32 %v213, %v218
    %v220 = vadd.f32 %v216, %v219
    %s221 = sld [smem:[#allocation6 + $0x2e]]
    %v222 = vstv %s221
    %v223 = vadd.f32 %v220, %v222
    %224 = vst [vmem:[#allocation7] sm:$0xff] %v223
    %s225 = sld [smem:[#allocation6 + $0x2c]]
    %v226 = vstv %s225
    %v227 = vmul.f32 %v194, %v226
    %s228 = sld [smem:[#allocation6 + $0x2d]]
    %v229 = vstv %s228
    %v230 = vmul.f32 %v213, %v229
    %v231 = vadd.f32 %v227, %v230
    %s232 = sld [smem:[#allocation6 + $0x2f]]
    %v233 = vstv %s232
    %v234 = vadd.f32 %v231, %v233
    %s235 = scalar_lea.vmem [#allocation7], 8
    %236 = vst [vmem:[%s235] sm:$0xff] %v234
    // Predicated region
    $region18: #{tpu_custom_call.1} parent=1 // pred_check
      _
    $region19: #{tpu_custom_call.1} parent=1 // pred_check_branch
      %238 = sbr.rel (0) target = $region21
    $region20: #{tpu_custom_call.1} parent=1 // pred_region
      %s240 = ssub.s32 256, 256
      %241 = vsyncadd [#allocation4], %s240
      %s242 = sshll.u32 [#allocation7], 4
      %s243 = int_to_ptr.vmem [resolvable:$true] %s242
      %248 = dma.vmem_to_hbm [thread:$0]  %s243, 256, %s2, [#allocation4], 128, 128, 8
    $region21: #{tpu_custom_call.1} parent=1 // pred_fallthru
      _
    // Predicated region
    $region22: #{tpu_custom_call.1} parent=1 // pred_check
      _
    $region23: #{tpu_custom_call.1} parent=1 // pred_check_branch
      %250 = sbr.rel (0) target = $region25
    $region24: #{tpu_custom_call.1} parent=1 // pred_region
      %251 = dma.done [#allocation4], 256
    $region25: #{tpu_custom_call.1} parent=1 // pred_fallthru
      _
    %252 = vsyncpa [#allocation3], 1
    %253 = vsyncpa [#allocation4], 1
    %254 = vsyncpa [#allocation5], 1

</llo_original>
